<compile_context>
chip_gen: v5e
topology: v5e:2x2
jax: 0.10.0
libtpu: 0.0.40
codegen_flags: <defaults>
</compile_context>

<pallas_src>
import jax
import jax.numpy as jnp
from jax.experimental import pallas as pl
from jax.experimental.pallas import tpu as pltpu


def _masking_kernel(x_ref, w_ref, b_ref, o1_ref, o2_ref):
    # x_ref : (H, tl)   channels on sublanes, length on lanes (native NCL tile)
    # w_ref : (2H, H)   fused [w1; w2] conv weights
    # b_ref : (2H, 1)   fused biases
    # o*_ref: (H, tl)
    h = o1_ref.shape[0]
    x = x_ref[...].astype(jnp.float32)
    y = jnp.dot(w_ref[...], x, preferred_element_type=jnp.float32) + b_ref[...]
    m = jax.nn.sigmoid(y)
    o1_ref[...] = (x * m[:h, :]).astype(o1_ref.dtype)
    o2_ref[...] = (x * m[h:, :]).astype(o2_ref.dtype)


def _choose_length_tile(hidden, length, itemsize, vmem_budget_bytes=24 * 1024 * 1024):
    """Largest lane-dense (multiple-of-128) tile along L that fits the VMEM budget."""
    if length <= 128:
        return length  # full-dim block is always legal, even if < 128
    # Fused weights + bias, assume double-buffered (f32).
    weight_bytes = 2 * (2 * hidden * hidden + 2 * hidden) * 4
    avail = max(vmem_budget_bytes - weight_bytes, 1 << 20)
    # x tile + two output tiles, each double-buffered -> 6 copies of (hidden, tl).
    tl = avail // (6 * hidden * itemsize)
    tl = max(128, min(2048, (tl // 128) * 128))
    tl = min(tl, pl.cdiv(length, 128) * 128)
    return tl


def masking_forward(x_ncl, w1, b1, w2, b2, *, length_tile=None):
    """x_ncl: (N, H, L) like the PyTorch module's NCL input.

    w1, w2: (H, H)  (PyTorch Conv1d weight with the trailing k=1 dim squeezed);
    b1, b2: (H,).
    Returns (x * sigmoid(conv1(x)), x * sigmoid(conv2(x))) with shape (N, H, L).
    """
    N, H, L = x_ncl.shape
    itemsize = jnp.dtype(x_ncl.dtype).itemsize
    tl = length_tile if length_tile is not None else _choose_length_tile(H, L, itemsize)

    # Fuse the two pointwise convs: one (2H, H) weight, one (2H, 1) bias.
    w_cat = jnp.concatenate([w1, w2], axis=0).astype(jnp.float32)          # (2H, H)
    b_cat = jnp.concatenate([b1, b2], axis=0).reshape(2 * H, 1).astype(jnp.float32)

    grid = (N, pl.cdiv(L, tl))
    x_spec = pl.BlockSpec((None, H, tl), lambda n, l: (n, 0, l))
    w_spec = pl.BlockSpec((2 * H, H), lambda n, l: (0, 0))
    b_spec = pl.BlockSpec((2 * H, 1), lambda n, l: (0, 0))
    out_spec = pl.BlockSpec((None, H, tl), lambda n, l: (n, 0, l))

    out1, out2 = pl.pallas_call(
        _masking_kernel,
        out_shape=(
            jax.ShapeDtypeStruct((N, H, L), x_ncl.dtype),
            jax.ShapeDtypeStruct((N, H, L), x_ncl.dtype),
        ),
        grid_spec=pltpu.PrefetchScalarGridSpec(
            num_scalar_prefetch=0,
            grid=grid,
            in_specs=[x_spec, w_spec, b_spec],
            out_specs=(out_spec, out_spec),
        ),
        compiler_params=pltpu.CompilerParams(
            dimension_semantics=("parallel", "parallel"),
        ),
    )(x_ncl, w_cat, b_cat)

    return out1, out2


def _reference(x_ncl, w1, b1, w2, b2):
    # Pure-JAX reference of the PyTorch forward (Conv1d k=1 == einsum over C).
    y1 = jnp.einsum("oc,ncl->nol", w1, x_ncl) + b1[None, :, None]
    y2 = jnp.einsum("oc,ncl->nol", w2, x_ncl) + b2[None, :, None]
    return x_ncl * jax.nn.sigmoid(y1), x_ncl * jax.nn.sigmoid(y2)


def _run_case(key, batch, hidden, seq):
    kx, kw1, kb1, kw2, kb2 = jax.random.split(key, 5)
    x = jax.random.normal(kx, (batch, hidden, seq), dtype=jnp.float32)
    scale = 1.0 / jnp.sqrt(hidden)
    w1 = jax.random.uniform(kw1, (hidden, hidden), jnp.float32, -scale, scale)
    b1 = jax.random.uniform(kb1, (hidden,), jnp.float32, -scale, scale)
    w2 = jax.random.uniform(kw2, (hidden, hidden), jnp.float32, -scale, scale)
    b2 = jax.random.uniform(kb2, (hidden,), jnp.float32, -scale, scale)

    out1, out2 = masking_forward(x, w1, b1, w2, b2)
    jax.block_until_ready((out1, out2))

    ref1, ref2 = _reference(x, w1, b1, w2, b2)
    assert out1.shape == x.shape and out2.shape == x.shape
    assert jnp.allclose(out1, ref1, atol=1e-5, rtol=1e-5)
    assert jnp.allclose(out2, ref2, atol=1e-5, rtol=1e-5)


if __name__ == "__main__":
    key = jax.random.PRNGKey(0)
    k1, k2 = jax.random.split(key)

    # Small shape matching the module's intended use (batch=2, hidden=32, seq=16).
    _run_case(k1, batch=2, hidden=32, seq=16)
    # Slightly larger case to exercise the lane-dense (multiple-of-128) tile path.
    _run_case(k2, batch=2, hidden=64, seq=256)

    print("KERNEL_OK")
</pallas_src>

<mosaic_0001>
module attributes {stable_mosaic.version = 11 : i64} {
  func.func @_masking_kernel(%arg0: i32, %arg1: i32, %arg2: memref<1x32x16xf32, #tpu.memory_space<vmem>>, %arg3: memref<64x32xf32, #tpu.memory_space<vmem>>, %arg4: memref<64x1xf32, #tpu.memory_space<vmem>>, %arg5: memref<1x32x16xf32, #tpu.memory_space<vmem>>, %arg6: memref<1x32x16xf32, #tpu.memory_space<vmem>>) attributes {dimension_semantics = [#tpu.dimension_semantics<parallel>, #tpu.dimension_semantics<parallel>], iteration_bounds = array<i64: 2, 1>, scalar_prefetch = 0 : i64, scratch_operands = 0 : i64, tpu.core_type = #tpu.core_type<tc>, window_params = [{transform_indices = @transform_0, window_bounds = array<i64: 1, 32, 16>}, {pipeline_mode = #tpu.pipeline_mode<synchronous>, transform_indices = @transform_1, window_bounds = array<i64: 64, 32>}, {pipeline_mode = #tpu.pipeline_mode<synchronous>, transform_indices = @transform_2, window_bounds = array<i64: 64, 1>}, {transform_indices = @transform_3, window_bounds = array<i64: 1, 32, 16>}, {transform_indices = @transform_4, window_bounds = array<i64: 1, 32, 16>}]} {
    %c0 = arith.constant 0 : index
    %c0_0 = arith.constant 0 : index
    %c0_1 = arith.constant 0 : index
    %0 = vector.load %arg2[%c0, %c0_0, %c0_1] : memref<1x32x16xf32, #tpu.memory_space<vmem>>, vector<1x32x16xf32>
    %1 = vector.shape_cast %0 : vector<1x32x16xf32> to vector<32x16xf32>
    %c0_2 = arith.constant 0 : index
    %c0_3 = arith.constant 0 : index
    %2 = vector.load %arg3[%c0_2, %c0_3] : memref<64x32xf32, #tpu.memory_space<vmem>>, vector<64x32xf32>
    %cst = arith.constant dense<0.000000e+00> : vector<64x16xf32>
    %3 = tpu.matmul %2, %1, %cst {dimension_numbers = #tpu.dot_dimension_numbers<[1], [0], [0], [1], [0, 0, 1, 1], [], []>} : vector<64x32xf32>, vector<32x16xf32>, vector<64x16xf32> -> vector<64x16xf32>
    %c0_4 = arith.constant 0 : index
    %c0_5 = arith.constant 0 : index
    %4 = vector.load %arg4[%c0_4, %c0_5] : memref<64x1xf32, #tpu.memory_space<vmem>>, vector<64x1xf32>
    %5 = vector.broadcast %4 : vector<64x1xf32> to vector<64x16xf32>
    %6 = arith.addf %3, %5 : vector<64x16xf32>
    %7 = arith.negf %6 : vector<64x16xf32>
    %8 = math.exp %7 : vector<64x16xf32>
    %cst_6 = arith.constant 1.000000e+00 : f32
    %9 = vector.broadcast %cst_6 : f32 to vector<64x16xf32>
    %10 = arith.addf %9, %8 : vector<64x16xf32>
    %11 = arith.divf %9, %10 : vector<64x16xf32>
    %12 = vector.extract_strided_slice %11 {offsets = [0, 0], sizes = [32, 16], strides = [1, 1]} : vector<64x16xf32> to vector<32x16xf32>
    %13 = arith.mulf %1, %12 : vector<32x16xf32>
    %c0_7 = arith.constant 0 : index
    %c0_8 = arith.constant 0 : index
    %c0_9 = arith.constant 0 : index
    %14 = vector.load %arg5[%c0_7, %c0_8, %c0_9] : memref<1x32x16xf32, #tpu.memory_space<vmem>>, vector<1x32x16xf32>
    %15 = vector.shape_cast %14 : vector<1x32x16xf32> to vector<32x16xf32>
    %16 = vector.shape_cast %13 : vector<32x16xf32> to vector<1x32x16xf32>
    tpu.vector_store %arg5[%c0_7, %c0_8, %c0_9], %16 {strides = array<i32>} : memref<1x32x16xf32, #tpu.memory_space<vmem>>, vector<1x32x16xf32>,
    %17 = vector.extract_strided_slice %11 {offsets = [32, 0], sizes = [32, 16], strides = [1, 1]} : vector<64x16xf32> to vector<32x16xf32>
    %18 = arith.mulf %1, %17 : vector<32x16xf32>
    %c0_10 = arith.constant 0 : index
    %c0_11 = arith.constant 0 : index
    %c0_12 = arith.constant 0 : index
    %19 = vector.load %arg6[%c0_10, %c0_11, %c0_12] : memref<1x32x16xf32, #tpu.memory_space<vmem>>, vector<1x32x16xf32>
    %20 = vector.shape_cast %19 : vector<1x32x16xf32> to vector<32x16xf32>
    %21 = vector.shape_cast %18 : vector<32x16xf32> to vector<1x32x16xf32>
    tpu.vector_store %arg6[%c0_10, %c0_11, %c0_12], %21 {strides = array<i32>} : memref<1x32x16xf32, #tpu.memory_space<vmem>>, vector<1x32x16xf32>,
    return
  }
  func.func @transform_0(%arg0: i32, %arg1: i32) -> (i32, i32, i32) {
    %c0_i32 = arith.constant 0 : i32
    %c0_i32_0 = arith.constant 0 : i32
    return %arg0, %c0_i32, %arg1 : i32, i32, i32
  }
  func.func @transform_1(%arg0: i32, %arg1: i32) -> (i32, i32) {
    %c0_i32 = arith.constant 0 : i32
    %c0_i32_0 = arith.constant 0 : i32
    %c0_i32_1 = arith.constant 0 : i32
    return %c0_i32, %c0_i32_0 : i32, i32
  }
  func.func @transform_2(%arg0: i32, %arg1: i32) -> (i32, i32) {
    %c0_i32 = arith.constant 0 : i32
    %c0_i32_0 = arith.constant 0 : i32
    %c0_i32_1 = arith.constant 0 : i32
    return %c0_i32, %c0_i32_0 : i32, i32
  }
  func.func @transform_3(%arg0: i32, %arg1: i32) -> (i32, i32, i32) {
    %c0_i32 = arith.constant 0 : i32
    %c0_i32_0 = arith.constant 0 : i32
    return %arg0, %c0_i32, %arg1 : i32, i32, i32
  }
  func.func @transform_4(%arg0: i32, %arg1: i32) -> (i32, i32, i32) {
    %c0_i32 = arith.constant 0 : i32
    %c0_i32_0 = arith.constant 0 : i32
    return %arg0, %c0_i32, %arg1 : i32, i32, i32
  }
}

</mosaic_0001>

<llo_original>
// kernel: tpu_custom_call.1
$region0: #{tpu_custom_call.1}
  #allocation0 [shape = 'u32[]', space=smem, size = 0x4, offset = 0x4, fixed_abs, tag = 'smem constant byte address 0x4 - core index']
  #allocation1 [shape = 'u32[72,128]{1,0:T(1,128)}', space=vmem, size = 0x9000, scoped, tag = 'internal scratch']
  %s0 = inlined_call_operand.vmem [shape: f32[2,32,16], index: 0, kind: input, shape index: {}]
  %s1 = inlined_call_operand.vmem [shape: f32[64,32], index: 1, kind: input, shape index: {}]
  %s2 = inlined_call_operand.vmem [shape: f32[64,1], index: 2, kind: input, shape index: {}]
  %s3 = inlined_call_operand.vmem [shape: f32[2,32,16], index: 3, kind: output, shape index: {0}]
  %s4 = inlined_call_operand.vmem [shape: f32[2,32,16], index: 4, kind: output, shape index: {1}]
  %5 = xla_tuple %s3, %s4
  %s6 = sld [smem:[#allocation0]]
  $region53: #{tpu_custom_call.1} parent=0
    _
  %s8 = ssub.s32 1, %s6
  %s9 = scalar_select 0, %s8, %s6
  loop: start=0, step=1, limit=4
  $region2: #{tpu_custom_call.1} parent=0 // loop_pre_header
    _
  $region3: #{tpu_custom_call.1} parent=0 // loop_header
    %s11 = sphi 0, %s15
    %p12 = scmp.ge.s32.totalorder %s11, 4
    %s18 = sphi 0, %s30
    %s19 = sphi 0, %s26
    %s20 = sphi 0, %s18
    %s21 = sphi 0, %s19
    %s22 = sphi 0, %s20
    %s23 = sphi 0, %s21
    %s35 = sphi 0, %s37
    %s38 = sphi 0, %s35
    %s39 = sphi 0, %s38
    %s55 = sphi 0, %s39
    %s59 = sphi 0, %s59
    %s61 = sphi 0, %s59
    %s62 = sphi 0, %s61
    %s76 = sphi 0, %s62
    %s80 = sphi 0, %s80
    %s82 = sphi 0, %s80
    %s83 = sphi 0, %s82
    %s97 = sphi 0, %s83
    %s105 = sphi 0, %s107
    %s108 = sphi 0, %s105
    %s109 = sphi 0, %s108
    %s125 = sphi 0, %s109
    %s133 = sphi 0, %s135
    %s136 = sphi 0, %s133
    %s137 = sphi 0, %s136
    %s153 = sphi 0, %s137
  $region4: #{tpu_custom_call.1} parent=0 // loop_header_branch
    %14 = sbr.rel (%p12) target = $region8
  $region5: #{tpu_custom_call.1} parent=0 // loop_body
    %s16 = ssub.s32 %s11, 1
    %s17 = ssub.s32 %s11, 2
    %s24 = sadd.s32 1, %s19
    %p25 = scmp.ge.s32.totalorder %s24, 1
    %s26 = scalar_select %p25, 0, %s24
    %s27 = sadd.s32 1, %s18
    %s28 = scalar_select %p25, %s27, %s18
    %p29 = scmp.ge.s32.totalorder %s28, 2
    %s30 = scalar_select %p29, 0, %s28
    %s31 = ssub.s32 %s18, %s30
    %s32 = ssub.s32 %s19, %s26
    %s33 = sor.u32 %s31, %s32
    %p34 = scmp.eq.s32.totalorder %s33, 0
    %s36 = sadd.s32 %s35, 1
    %s37 = scalar_select %p34, %s35, %s36
    %p40 = pneg %p34
    %p41 = scmp.eq.s32.totalorder %s11, 1
    %p42 = por %p40, %p41
    %p43 = scmp.ne.s32.totalorder %s35, %s38
    %p44 = scmp.eq.s32.totalorder %s11, 0
    %p45 = por %p43, %p44
    %p46 = scmp.ne.s32.totalorder %s35, %s38
    %p47 = scmp.eq.s32.totalorder %s16, 1
    %p48 = por %p46, %p47
    %p49 = scmp.ne.s32.totalorder %s38, %s39
    %p50 = scmp.eq.s32.totalorder %s16, 0
    %p51 = por %p49, %p50
    %p52 = scmp.ne.s32.totalorder %s38, %s39
    %p53 = scmp.eq.s32.totalorder %s17, 1
    %p54 = por %p52, %p53
    %p56 = scmp.ne.s32.totalorder %s39, %s55
    %p57 = scmp.eq.s32.totalorder %s17, 0
    %p58 = por %p56, %p57
    %s60 = sadd.s32 %s59, 1
    %p63 = scmp.eq.s32.totalorder %s11, 1
    %p64 = scmp.ne.s32.totalorder %s59, %s61
    %p65 = scmp.eq.s32.totalorder %s11, 0
    %p66 = por %p64, %p65
    %p67 = scmp.ne.s32.totalorder %s59, %s61
    %p68 = scmp.eq.s32.totalorder %s16, 1
    %p69 = por %p67, %p68
    %p70 = scmp.ne.s32.totalorder %s61, %s62
    %p71 = scmp.eq.s32.totalorder %s16, 0
    %p72 = por %p70, %p71
    %p73 = scmp.ne.s32.totalorder %s61, %s62
    %p74 = scmp.eq.s32.totalorder %s17, 1
    %p75 = por %p73, %p74
    %p77 = scmp.ne.s32.totalorder %s62, %s76
    %p78 = scmp.eq.s32.totalorder %s17, 0
    %p79 = por %p77, %p78
    %s81 = sadd.s32 %s80, 1
    %p84 = scmp.eq.s32.totalorder %s11, 1
    %p85 = scmp.ne.s32.totalorder %s80, %s82
    %p86 = scmp.eq.s32.totalorder %s11, 0
    %p87 = por %p85, %p86
    %p88 = scmp.ne.s32.totalorder %s80, %s82
    %p89 = scmp.eq.s32.totalorder %s16, 1
    %p90 = por %p88, %p89
    %p91 = scmp.ne.s32.totalorder %s82, %s83
    %p92 = scmp.eq.s32.totalorder %s16, 0
    %p93 = por %p91, %p92
    %p94 = scmp.ne.s32.totalorder %s82, %s83
    %p95 = scmp.eq.s32.totalorder %s17, 1
    %p96 = por %p94, %p95
    %p98 = scmp.ne.s32.totalorder %s83, %s97
    %p99 = scmp.eq.s32.totalorder %s17, 0
    %p100 = por %p98, %p99
    %s101 = ssub.s32 %s18, %s30
    %s102 = ssub.s32 %s19, %s26
    %s103 = sor.u32 %s101, %s102
    %p104 = scmp.eq.s32.totalorder %s103, 0
    %s106 = sadd.s32 %s105, 1
    %s107 = scalar_select %p104, %s105, %s106
    %p110 = pneg %p104
    %p111 = scmp.eq.s32.totalorder %s11, 1
    %p112 = por %p110, %p111
    %p113 = scmp.ne.s32.totalorder %s105, %s108
    %p114 = scmp.eq.s32.totalorder %s11, 0
    %p115 = por %p113, %p114
    %p116 = scmp.ne.s32.totalorder %s105, %s108
    %p117 = scmp.eq.s32.totalorder %s16, 1
    %p118 = por %p116, %p117
    %p119 = scmp.ne.s32.totalorder %s108, %s109
    %p120 = scmp.eq.s32.totalorder %s16, 0
    %p121 = por %p119, %p120
    %p122 = scmp.ne.s32.totalorder %s108, %s109
    %p123 = scmp.eq.s32.totalorder %s17, 1
    %p124 = por %p122, %p123
    %p126 = scmp.ne.s32.totalorder %s109, %s125
    %p127 = scmp.eq.s32.totalorder %s17, 0
    %p128 = por %p126, %p127
    %s129 = ssub.s32 %s18, %s30
    %s130 = ssub.s32 %s19, %s26
    %s131 = sor.u32 %s129, %s130
    %p132 = scmp.eq.s32.totalorder %s131, 0
    %s134 = sadd.s32 %s133, 1
    %s135 = scalar_select %p132, %s133, %s134
    %p138 = pneg %p132
    %p139 = scmp.eq.s32.totalorder %s11, 1
    %p140 = por %p138, %p139
    %p141 = scmp.ne.s32.totalorder %s133, %s136
    %p142 = scmp.eq.s32.totalorder %s11, 0
    %p143 = por %p141, %p142
    %p144 = scmp.ne.s32.totalorder %s133, %s136
    %p145 = scmp.eq.s32.totalorder %s16, 1
    %p146 = por %p144, %p145
    %p147 = scmp.ne.s32.totalorder %s136, %s137
    %p148 = scmp.eq.s32.totalorder %s16, 0
    %p149 = por %p147, %p148
    %p150 = scmp.ne.s32.totalorder %s136, %s137
    %p151 = scmp.eq.s32.totalorder %s17, 1
    %p152 = por %p150, %p151
    %p154 = scmp.ne.s32.totalorder %s137, %s153
    %p155 = scmp.eq.s32.totalorder %s17, 0
    %p156 = por %p154, %p155
    %p157 = scmp.le.s32.totalorder 1, %s11
    %p158 = scmp.lt.s32.totalorder %s11, 3
    %p159 = pnand %p157, %p158
    %p160 = pneg %p159
    // Predicated region
    $region9: #{tpu_custom_call.1} parent=5 // pred_check
      _
    $region10: #{tpu_custom_call.1} parent=5 // pred_check_branch
      %162 = sbr.rel (%p159) target = $region12
    $region11: #{tpu_custom_call.1} parent=5 // pred_region
      %s163 = ssub.s32 %s11, 1
      // Predicated region
      $region13: #{tpu_custom_call.1} parent=11 // pred_check
        %p164 = pneg %p72
      $region14: #{tpu_custom_call.1} parent=11 // pred_check_branch
        %166 = sbr.rel (%p164) target = $region16
      $region15: #{tpu_custom_call.1} parent=11 // pred_region
        _
      $region16: #{tpu_custom_call.1} parent=11 // pred_fallthru
        _
      // Predicated region
      $region17: #{tpu_custom_call.1} parent=11 // pred_check
        %p167 = pneg %p93
      $region18: #{tpu_custom_call.1} parent=11 // pred_check_branch
        %169 = sbr.rel (%p167) target = $region20
      $region19: #{tpu_custom_call.1} parent=11 // pred_region
        _
      $region20: #{tpu_custom_call.1} parent=11 // pred_fallthru
        _
    $region12: #{tpu_custom_call.1} parent=5 // pred_fallthru
      _
    %p170 = scmp.lt.s32.totalorder %s11, 2
    // Predicated region
    $region21: #{tpu_custom_call.1} parent=5 // pred_check
      %p171 = pneg %p170
    $region22: #{tpu_custom_call.1} parent=5 // pred_check_branch
      %173 = sbr.rel (%p171) target = $region24
    $region23: #{tpu_custom_call.1} parent=5 // pred_region
      // Predicated region
      $region25: #{tpu_custom_call.1} parent=23 // pred_check
        %p174 = pneg %p45
      $region26: #{tpu_custom_call.1} parent=23 // pred_check_branch
        %176 = sbr.rel (%p174) target = $region28
      $region27: #{tpu_custom_call.1} parent=23 // pred_region
        %p177 = scmp.lt.s32.totalorder %s18, 1
        %s178 = scalar_select %p177, %s18, 1
        %p179 = scmp.lt.s32.totalorder %s19, 0
        %s180 = scalar_select %p179, %s19, 0
        %s181 = smul.addr %s178, 4
        %s182 = sadd.s32 %s180, %s181
        %s183 = smul.addr %s182, 8
        %s184 = scalar_lea.vmem %s0, %s183
      $region28: #{tpu_custom_call.1} parent=23 // pred_fallthru
        _
    $region24: #{tpu_custom_call.1} parent=5 // pred_fallthru
      _
    %p185 = scmp.le.s32.totalorder 1, %s11
    %p186 = scmp.lt.s32.totalorder %s11, 3
    %p187 = pnand %p185, %p186
    %p188 = pneg %p187
    // Predicated region
    $region29: #{tpu_custom_call.1} parent=5 // pred_check
      _
    $region30: #{tpu_custom_call.1} parent=5 // pred_check_branch
      %190 = sbr.rel (%p187) target = $region32
    $region31: #{tpu_custom_call.1} parent=5 // pred_region
      %s191 = ssub.s32 %s11, 1
      %p192 = scmp.lt.s32.totalorder %s20, 1
      %s193 = scalar_select %p192, %s20, 1
      %p194 = scmp.lt.s32.totalorder %s21, 0
      %s195 = scalar_select %p194, %s21, 0
      %s196 = smul.addr %s193, 4
      %s197 = sadd.s32 %s195, %s196
      %s198 = smul.addr %s197, 8
      %s199 = scalar_lea.vmem %s0, %s198
      %p200 = pneg %p51
      %p201 = pneg %p48
      %p202 = pneg %p72
      %p203 = pneg %p69
      %p204 = pneg %p93
      %p205 = pneg %p90
      %p206 = pneg %p121
      %p207 = pneg %p118
      %p208 = scmp.lt.s32.totalorder %s20, 1
      %s209 = scalar_select %p208, %s20, 1
      %p210 = scmp.lt.s32.totalorder %s21, 0
      %s211 = scalar_select %p210, %s21, 0
      %s212 = smul.addr %s209, 4
      %s213 = sadd.s32 %s211, %s212
      %s214 = smul.addr %s213, 8
      %s215 = scalar_lea.vmem %s3, %s214
      %p216 = pneg %p149
      %p217 = pneg %p146
      %p218 = scmp.lt.s32.totalorder %s20, 1
      %s219 = scalar_select %p218, %s20, 1
      %p220 = scmp.lt.s32.totalorder %s21, 0
      %s221 = scalar_select %p220, %s21, 0
      %s222 = smul.addr %s219, 4
      %s223 = sadd.s32 %s221, %s222
      %s224 = smul.addr %s223, 8
      %s225 = scalar_lea.vmem %s4, %s224
      %p226 = scmp.lt.s32.totalorder %s20, 1
      %s227 = scalar_select %p226, %s20, 1
      %p228 = scmp.lt.s32.totalorder %s21, 0
      %s229 = scalar_select %p228, %s21, 0
      %s230 = smul.addr %s227, 4
      %s231 = sadd.s32 %s229, %s230
      %s232 = smul.addr %s231, 8
      %s233 = scalar_lea.vmem %s0, %s232
      %p234 = scmp.lt.s32.totalorder %s20, 1
      %s235 = scalar_select %p234, %s20, 1
      %p236 = scmp.lt.s32.totalorder %s21, 0
      %s237 = scalar_select %p236, %s21, 0
      %s238 = smul.addr %s235, 4
      %s239 = sadd.s32 %s237, %s238
      %s240 = smul.addr %s239, 8
      %s241 = scalar_lea.vmem %s3, %s240
      %p242 = scmp.lt.s32.totalorder %s20, 1
      %s243 = scalar_select %p242, %s20, 1
      %p244 = scmp.lt.s32.totalorder %s21, 0
      %s245 = scalar_select %p244, %s21, 0
      %s246 = smul.addr %s243, 4
      %s247 = sadd.s32 %s245, %s246
      %s248 = smul.addr %s247, 8
      %s249 = scalar_lea.vmem %s4, %s248
      %v250 = vld [vmem:[%s233] sm:$0xff]
      %v251 = vld [vmem:[%s233 + $0x8] sm:$0xff]
      %v252 = vld [vmem:[%s233 + $0x10] sm:$0xff]
      %v253 = vld [vmem:[%s233 + $0x18] sm:$0xff]
      %v254 = vld [vmem:[%s1] sm:$0xff]
      %v255 = vld [vmem:[%s1 + $0x8] sm:$0xff]
      %v256 = vld [vmem:[%s1 + $0x10] sm:$0xff]
      %v257 = vld [vmem:[%s1 + $0x18] sm:$0xff]
      %v258 = vld [vmem:[%s1 + $0x20] sm:$0xff]
      %v259 = vld [vmem:[%s1 + $0x28] sm:$0xff]
      %v260 = vld [vmem:[%s1 + $0x30] sm:$0xff]
      %v261 = vld [vmem:[%s1 + $0x38] sm:$0xff]
      %v262 = vld [vmem:[%s2] sm:$0xff]
      %v263 = vld [vmem:[%s2 + $0x8] sm:$0xff]
      %v264 = vld [vmem:[%s2 + $0x10] sm:$0xff]
      %v265 = vld [vmem:[%s2 + $0x18] sm:$0xff]
      %v266 = vld [vmem:[%s2 + $0x20] sm:$0xff]
      %v267 = vld [vmem:[%s2 + $0x28] sm:$0xff]
      %v268 = vld [vmem:[%s2 + $0x30] sm:$0xff]
      %v269 = vld [vmem:[%s2 + $0x38] sm:$0xff]
      %271 = vset.pattern.permute.xlu0 0
      %272 = vperm.xlu0 %271, %v262
      %v273 = vpop.permute.xlu0 %272
      %276 = vset.pattern.permute.xlu0 0
      %277 = vperm.xlu0 %276, %v263
      %v278 = vpop.permute.xlu0 %277
      %281 = vset.pattern.permute.xlu0 0
      %282 = vperm.xlu0 %281, %v264
      %v283 = vpop.permute.xlu0 %282
      %286 = vset.pattern.permute.xlu0 0
      %287 = vperm.xlu0 %286, %v265
      %v288 = vpop.permute.xlu0 %287
      %291 = vset.pattern.permute.xlu0 0
      %292 = vperm.xlu0 %291, %v266
      %v293 = vpop.permute.xlu0 %292
      %296 = vset.pattern.permute.xlu0 0
      %297 = vperm.xlu0 %296, %v267
      %v298 = vpop.permute.xlu0 %297
      %301 = vset.pattern.permute.xlu0 0
      %302 = vperm.xlu0 %301, %v268
      %v303 = vpop.permute.xlu0 %302
      %306 = vset.pattern.permute.xlu0 0
      %307 = vperm.xlu0 %306, %v269
      %v308 = vpop.permute.xlu0 %307
      %vm310 = vcmask 261120
      %v312 = vsel %vm310, %v254, 0
      %v315 = vsel %vm310, %v255, 0
      %v318 = vsel %vm310, %v256, 0
      %v321 = vsel %vm310, %v257, 0
      %v324 = vsel %vm310, %v258, 0
      %v327 = vsel %vm310, %v259, 0
      %v330 = vsel %vm310, %v260, 0
      %v333 = vsel %vm310, %v261, 0
      %335 = vmatpush.msra.mxu0 0.0
      %336 = vmatpush.msra.mxu0 0.0
      %337 = vmatpush.msra.mxu0 0.0
      %338 = vmatpush.msra.mxu0 0.0
      %339 = vmatpush.msra.mxu0 0.0
      %340 = vmatpush.msra.mxu0 0.0
      %341 = vmatpush.msra.mxu0 0.0
      %342 = vmatpush.msra.mxu0 0.0
      %343 = vmatpush.msra.mxu0 0.0
      %344 = vmatpush.msra.mxu0 0.0
      %345 = vmatpush.msra.mxu0 0.0
      %346 = vmatpush.msra.mxu0 0.0
      %347 = vmatpush.msra.mxu0 %v253
      %348 = vmatpush.msra.mxu0 %v252
      %349 = vmatpush.msra.mxu0 %v251
      %350 = vmatpush.msra.mxu0 %v250
      %351 = vmatmul.f32.gmra.mxu0 %v312
      %v352 = vpop.f32.mrf.mxu0
      %v353 = vadd.f32 %v273, %v352
      %354 = vmatmul.f32.gmra.mxu0 %v315
      %v355 = vpop.f32.mrf.mxu0
      %v356 = vadd.f32 %v278, %v355
      %357 = vmatmul.f32.gmra.mxu0 %v318
      %v358 = vpop.f32.mrf.mxu0
      %v359 = vadd.f32 %v283, %v358
      %360 = vmatmul.f32.gmra.mxu0 %v321
      %v361 = vpop.f32.mrf.mxu0
      %v362 = vadd.f32 %v288, %v361
      %363 = vmatmul.f32.gmra.mxu0 %v324
      %v364 = vpop.f32.mrf.mxu0
      %v365 = vadd.f32 %v293, %v364
      %366 = vmatmul.f32.gmra.mxu0 %v327
      %v367 = vpop.f32.mrf.mxu0
      %v368 = vadd.f32 %v298, %v367
      %369 = vmatmul.f32.gmra.mxu0 %v330
      %v370 = vpop.f32.mrf.mxu0
      %v371 = vadd.f32 %v303, %v370
      %372 = vmatmul.f32.gmra.mxu0 %v333
      %v373 = vpop.f32.mrf.mxu0
      %v374 = vadd.f32 %v308, %v373
      %375 = vdwg.mxu0
      %v376 = vxor.u32 %v353, 2147483648
      %v377 = vxor.u32 %v356, 2147483648
      %v378 = vxor.u32 %v359, 2147483648
      %v379 = vxor.u32 %v362, 2147483648
      %v380 = vxor.u32 %v365, 2147483648
      %v381 = vxor.u32 %v368, 2147483648
      %v382 = vxor.u32 %v371, 2147483648
      %v383 = vxor.u32 %v374, 2147483648
      %v384 = vmul.f32 %v376, 1.442695
      %v385 = vpow.pop %v384
      %v386 = vmul.f32 %v377, 1.442695
      %v387 = vpow.pop %v386
      %v388 = vmul.f32 %v378, 1.442695
      %v389 = vpow.pop %v388
      %v390 = vmul.f32 %v379, 1.442695
      %v391 = vpow.pop %v390
      %v392 = vmul.f32 %v380, 1.442695
      %v393 = vpow.pop %v392
      %v394 = vmul.f32 %v381, 1.442695
      %v395 = vpow.pop %v394
      %v396 = vmul.f32 %v382, 1.442695
      %v397 = vpow.pop %v396
      %v398 = vmul.f32 %v383, 1.442695
      %v399 = vpow.pop %v398
      %v400 = vadd.f32 %v385, 1.0
      %v401 = vadd.f32 %v387, 1.0
      %v402 = vadd.f32 %v389, 1.0
      %v403 = vadd.f32 %v391, 1.0
      %v404 = vadd.f32 %v393, 1.0
      %v405 = vadd.f32 %v395, 1.0
      %v406 = vadd.f32 %v397, 1.0
      %v407 = vadd.f32 %v399, 1.0
      %v408 = vrcp.pop %v400
      %v409 = vmul.f32 %v400, %v408
      %v410 = vsub.f32 1.0, %v409
      %v411 = vmul.f32 %v408, %v410
      %v412 = vadd.f32 %v408, %v411
      %vm413 = vweird.f32 %v400
      %vm414 = vweird.f32 %v408
      %vm415 = vmor %vm413, %vm414
      %v416 = vsel %vm415, %v408, %v412
      %v417 = vand.u32 2147483647, %v400
      %vm418 = vcmp.eq.f32.partialorder %v417, 8.507059e+37
      %v419 = vand.u32 %v400, 2147483648
      %v420 = vor.u32 1.1754944e-38, %v419
      %v421 = vsel %vm418, %v420, %v416
      %v422 = vmul.f32 1.0, %v421
      %v423 = vrcp.pop %v401
      %v424 = vmul.f32 %v401, %v423
      %v425 = vsub.f32 1.0, %v424
      %v426 = vmul.f32 %v423, %v425
      %v427 = vadd.f32 %v423, %v426
      %vm428 = vweird.f32 %v401
      %vm429 = vweird.f32 %v423
      %vm430 = vmor %vm428, %vm429
      %v431 = vsel %vm430, %v423, %v427
      %v432 = vand.u32 2147483647, %v401
      %vm433 = vcmp.eq.f32.partialorder %v432, 8.507059e+37
      %v434 = vand.u32 %v401, 2147483648
      %v435 = vor.u32 1.1754944e-38, %v434
      %v436 = vsel %vm433, %v435, %v431
      %v437 = vmul.f32 1.0, %v436
      %v438 = vrcp.pop %v402
      %v439 = vmul.f32 %v402, %v438
      %v440 = vsub.f32 1.0, %v439
      %v441 = vmul.f32 %v438, %v440
      %v442 = vadd.f32 %v438, %v441
      %vm443 = vweird.f32 %v402
      %vm444 = vweird.f32 %v438
      %vm445 = vmor %vm443, %vm444
      %v446 = vsel %vm445, %v438, %v442
      %v447 = vand.u32 2147483647, %v402
      %vm448 = vcmp.eq.f32.partialorder %v447, 8.507059e+37
      %v449 = vand.u32 %v402, 2147483648
      %v450 = vor.u32 1.1754944e-38, %v449
      %v451 = vsel %vm448, %v450, %v446
      %v452 = vmul.f32 1.0, %v451
      %v453 = vrcp.pop %v403
      %v454 = vmul.f32 %v403, %v453
      %v455 = vsub.f32 1.0, %v454
      %v456 = vmul.f32 %v453, %v455
      %v457 = vadd.f32 %v453, %v456
      %vm458 = vweird.f32 %v403
      %vm459 = vweird.f32 %v453
      %vm460 = vmor %vm458, %vm459
      %v461 = vsel %vm460, %v453, %v457
      %v462 = vand.u32 2147483647, %v403
      %vm463 = vcmp.eq.f32.partialorder %v462, 8.507059e+37
      %v464 = vand.u32 %v403, 2147483648
      %v465 = vor.u32 1.1754944e-38, %v464
      %v466 = vsel %vm463, %v465, %v461
      %v467 = vmul.f32 1.0, %v466
      %v468 = vrcp.pop %v404
      %v469 = vmul.f32 %v404, %v468
      %v470 = vsub.f32 1.0, %v469
      %v471 = vmul.f32 %v468, %v470
      %v472 = vadd.f32 %v468, %v471
      %vm473 = vweird.f32 %v404
      %vm474 = vweird.f32 %v468
      %vm475 = vmor %vm473, %vm474
      %v476 = vsel %vm475, %v468, %v472
      %v477 = vand.u32 2147483647, %v404
      %vm478 = vcmp.eq.f32.partialorder %v477, 8.507059e+37
      %v479 = vand.u32 %v404, 2147483648
      %v480 = vor.u32 1.1754944e-38, %v479
      %v481 = vsel %vm478, %v480, %v476
      %v482 = vmul.f32 1.0, %v481
      %v483 = vrcp.pop %v405
      %v484 = vmul.f32 %v405, %v483
      %v485 = vsub.f32 1.0, %v484
      %v486 = vmul.f32 %v483, %v485
      %v487 = vadd.f32 %v483, %v486
      %vm488 = vweird.f32 %v405
      %vm489 = vweird.f32 %v483
      %vm490 = vmor %vm488, %vm489
      %v491 = vsel %vm490, %v483, %v487
      %v492 = vand.u32 2147483647, %v405
      %vm493 = vcmp.eq.f32.partialorder %v492, 8.507059e+37
      %v494 = vand.u32 %v405, 2147483648
      %v495 = vor.u32 1.1754944e-38, %v494
      %v496 = vsel %vm493, %v495, %v491
      %v497 = vmul.f32 1.0, %v496
      %v498 = vrcp.pop %v406
      %v499 = vmul.f32 %v406, %v498
      %v500 = vsub.f32 1.0, %v499
      %v501 = vmul.f32 %v498, %v500
      %v502 = vadd.f32 %v498, %v501
      %vm503 = vweird.f32 %v406
      %vm504 = vweird.f32 %v498
      %vm505 = vmor %vm503, %vm504
      %v506 = vsel %vm505, %v498, %v502
      %v507 = vand.u32 2147483647, %v406
      %vm508 = vcmp.eq.f32.partialorder %v507, 8.507059e+37
      %v509 = vand.u32 %v406, 2147483648
      %v510 = vor.u32 1.1754944e-38, %v509
      %v511 = vsel %vm508, %v510, %v506
      %v512 = vmul.f32 1.0, %v511
      %v513 = vrcp.pop %v407
      %v514 = vmul.f32 %v407, %v513
      %v515 = vsub.f32 1.0, %v514
      %v516 = vmul.f32 %v513, %v515
      %v517 = vadd.f32 %v513, %v516
      %vm518 = vweird.f32 %v407
      %vm519 = vweird.f32 %v513
      %vm520 = vmor %vm518, %vm519
      %v521 = vsel %vm520, %v513, %v517
      %v522 = vand.u32 2147483647, %v407
      %vm523 = vcmp.eq.f32.partialorder %v522, 8.507059e+37
      %v524 = vand.u32 %v407, 2147483648
      %v525 = vor.u32 1.1754944e-38, %v524
      %v526 = vsel %vm523, %v525, %v521
      %v527 = vmul.f32 1.0, %v526
      %v528 = vmul.f32 %v250, %v422
      %v529 = vmul.f32 %v251, %v437
      %v530 = vmul.f32 %v252, %v452
      %v531 = vmul.f32 %v253, %v467
      %vm532 = vcmask 130048
      %533 = vst.msk [vmem:[%s241] sm:$0xff] %vm532, %v528
      %534 = vst.msk [vmem:[%s241 + $0x8] sm:$0xff] %vm532, %v529
      %535 = vst.msk [vmem:[%s241 + $0x10] sm:$0xff] %vm532, %v530
      %536 = vst.msk [vmem:[%s241 + $0x18] sm:$0xff] %vm532, %v531
      %v537 = vmul.f32 %v250, %v482
      %v538 = vmul.f32 %v251, %v497
      %v539 = vmul.f32 %v252, %v512
      %v540 = vmul.f32 %v253, %v527
      %541 = vst.msk [vmem:[%s249] sm:$0xff] %vm532, %v537
      %542 = vst.msk [vmem:[%s249 + $0x8] sm:$0xff] %vm532, %v538
      %543 = vst.msk [vmem:[%s249 + $0x10] sm:$0xff] %vm532, %v539
      %544 = vst.msk [vmem:[%s249 + $0x18] sm:$0xff] %vm532, %v540
      %p545 = scmp.lt.s32.totalorder %s20, 1
      %s546 = scalar_select %p545, %s20, 1
      %p547 = scmp.lt.s32.totalorder %s21, 0
      %s548 = scalar_select %p547, %s21, 0
      %s549 = smul.addr %s546, 4
      %s550 = sadd.s32 %s548, %s549
      %s551 = smul.addr %s550, 8
      %s552 = scalar_lea.vmem %s3, %s551
      %p553 = scmp.lt.s32.totalorder %s20, 1
      %s554 = scalar_select %p553, %s20, 1
      %p555 = scmp.lt.s32.totalorder %s21, 0
      %s556 = scalar_select %p555, %s21, 0
      %s557 = smul.addr %s554, 4
      %s558 = sadd.s32 %s556, %s557
      %s559 = smul.addr %s558, 8
      %s560 = scalar_lea.vmem %s4, %s559
      // Predicated region
      $region33: #{tpu_custom_call.1} parent=31 // pred_check
        %p561 = pneg %p118
      $region34: #{tpu_custom_call.1} parent=31 // pred_check_branch
        %563 = sbr.rel (%p561) target = $region36
      $region35: #{tpu_custom_call.1} parent=31 // pred_region
        _
      $region36: #{tpu_custom_call.1} parent=31 // pred_fallthru
        _
      // Predicated region
      $region37: #{tpu_custom_call.1} parent=31 // pred_check
        %p564 = pneg %p146
      $region38: #{tpu_custom_call.1} parent=31 // pred_check_branch
        %566 = sbr.rel (%p564) target = $region40
      $region39: #{tpu_custom_call.1} parent=31 // pred_region
        _
      $region40: #{tpu_custom_call.1} parent=31 // pred_fallthru
        _
    $region32: #{tpu_custom_call.1} parent=5 // pred_fallthru
      _
    %p567 = scmp.le.s32.totalorder 2, %s11
    // Predicated region
    $region41: #{tpu_custom_call.1} parent=5 // pred_check
      %p568 = pneg %p567
    $region42: #{tpu_custom_call.1} parent=5 // pred_check_branch
      %570 = sbr.rel (%p568) target = $region44
    $region43: #{tpu_custom_call.1} parent=5 // pred_region
      %s571 = ssub.s32 %s11, 2
      // Predicated region
      $region45: #{tpu_custom_call.1} parent=43 // pred_check
        %p572 = pneg %p124
      $region46: #{tpu_custom_call.1} parent=43 // pred_check_branch
        %574 = sbr.rel (%p572) target = $region48
      $region47: #{tpu_custom_call.1} parent=43 // pred_region
        %p575 = scmp.lt.s32.totalorder %s22, 1
        %s576 = scalar_select %p575, %s22, 1
        %p577 = scmp.lt.s32.totalorder %s23, 0
        %s578 = scalar_select %p577, %s23, 0
        %s579 = smul.addr %s576, 4
        %s580 = sadd.s32 %s578, %s579
        %s581 = smul.addr %s580, 8
        %s582 = scalar_lea.vmem %s3, %s581
      $region48: #{tpu_custom_call.1} parent=43 // pred_fallthru
        _
      // Predicated region
      $region49: #{tpu_custom_call.1} parent=43 // pred_check
        %p583 = pneg %p152
      $region50: #{tpu_custom_call.1} parent=43 // pred_check_branch
        %585 = sbr.rel (%p583) target = $region52
      $region51: #{tpu_custom_call.1} parent=43 // pred_region
        %p586 = scmp.lt.s32.totalorder %s22, 1
        %s587 = scalar_select %p586, %s22, 1
        %p588 = scmp.lt.s32.totalorder %s23, 0
        %s589 = scalar_select %p588, %s23, 0
        %s590 = smul.addr %s587, 4
        %s591 = sadd.s32 %s589, %s590
        %s592 = smul.addr %s591, 8
        %s593 = scalar_lea.vmem %s4, %s592
      $region52: #{tpu_custom_call.1} parent=43 // pred_fallthru
        _
    $region44: #{tpu_custom_call.1} parent=5 // pred_fallthru
      _
  $region6: #{tpu_custom_call.1} parent=0 // loop_footer
    %s15 = sadd.s32 1, %s11
  $region7: #{tpu_custom_call.1} parent=0 // loop_footer_branch
    %10 = sbr.rel target = $region3
  $region8: #{tpu_custom_call.1} parent=0 // loop_exit
    _

</llo_original>
